<compile_context>
chip_gen: v7x
topology: tpu7x:2x2x1
jax: 0.10.0
libtpu: 0.0.40
codegen_flags: <defaults>
</compile_context>

<pallas_src>
import jax
import jax.numpy as jnp
from jax.experimental import pallas as pl
from jax.experimental.pallas import tpu as pltpu

LN_EPS = 1e-5  # torch.nn.LayerNorm default


def _wordemb_enc_kernel(x_ref, avgb_ref, w_ref, cs_ref, b_ref, o_ref):
    """Fused LayerNorm -> Linear -> tanh on one lane-dense row-slab tile.

    x_ref    : (tile_r, P*D)   packed embeddings (P logical rows per slab row)
    avgb_ref : (P*D, P*E) bf16 group-average matrix (1/D where in-group==out-group)
    w_ref    : (P*D, P*E) bf16 block-diagonal, affine-folded weight
    cs_ref   : (1, P*E)   f32  per-group column sums of the folded weight
    b_ref    : (1, P*E)   f32  affine-folded bias, tiled P times
    o_ref    : (tile_r, P*E)
    """
    tile_r = x_ref.shape[0]

    x_bf = x_ref[...].astype(jnp.bfloat16)

    # Main matmul on the raw (uncentered) input: bf16 MXU operands, f32 acc.
    # Independent of the stats stream -> fully overlaps with it.
    z = jnp.dot(x_bf, w_ref[...], preferred_element_type=jnp.float32)

    # One stacked bf16 stats matmul: rows [0, tile_r) give per-group mean,
    # rows [tile_r, 2*tile_r) give per-group E[x^2]; avgb also broadcasts the
    # statistics across each output lane group.  Accumulation stays in f32.
    x32 = x_ref[...].astype(jnp.float32)
    sq_bf = (x32 * x32).astype(jnp.bfloat16)
    stacked = jnp.concatenate([x_bf, sq_bf], axis=0)          # (2*tile_r, P*D)
    stats = jnp.dot(stacked, avgb_ref[...],
                    preferred_element_type=jnp.float32)       # (2*tile_r, P*E)
    mean = stats[:tile_r, :]
    meansq = stats[tile_r:, :]

    # var = E[x^2] - mean^2 (f32 VPU; EUP rsqrt).
    var = meansq - mean * mean
    inv_std = jax.lax.rsqrt(var + LN_EPS)

    # Centering folded into the matmul: (x - mean) @ W' = z - mean * colsum(W').
    y = inv_std * (z - mean * cs_ref[...]) + b_ref[...]
    o_ref[...] = jnp.tanh(y).astype(o_ref.dtype)


def _round_up(x, m):
    return ((x + m - 1) // m) * m


def _pack_factor(d, e):
    """Smallest P such that P*d and P*e are both multiples of the 128-lane width."""
    p = 1
    while (p * d) % 128 or (p * e) % 128:
        p += 1
    return p


def _choose_tiling(rows, cap, *, align=16, min_steps=2):
    """Pick (tile_r, padded_rows, n_steps).

    Large 16-row-aligned tiles; rows are padded up to a tile multiple instead
    of requiring an exact divisor (so rows = 8*prime no longer collapses to
    tiny tiles).  Whenever rows >= 2*align this yields >= 2 grid steps, so the
    "parallel" grid axis can shard across v7x's two TensorCores.
    """
    rows = max(rows, align)
    tile_r = min(cap, _round_up(pl.cdiv(rows, min_steps), align))
    n_steps = pl.cdiv(rows, tile_r)
    return tile_r, n_steps * tile_r, n_steps


def word_embedding_encoder(emb, gamma, beta, w, b, *, tile_cap=1024):
    """emb: (B, S, D).  Returns (B, S, E) = tanh(Linear(LayerNorm(emb)))."""
    B, S, D = emb.shape
    Dw, E = w.shape
    assert Dw == D
    M = B * S

    f32 = jnp.float32
    gamma32 = gamma.astype(f32)
    beta32 = beta.astype(f32)
    w32 = w.astype(f32)
    b32 = b.astype(f32)

    # ---- fold the LayerNorm affine into the linear layer (exact, f32) ------
    w_aff = gamma32[:, None] * w32              # (D, E)
    b_aff = beta32 @ w32 + b32                  # (E,)
    colsum = jnp.sum(w_aff, axis=0)             # (E,)  for folded centering

    # ---- lane-dense packing -------------------------------------------------
    P = _pack_factor(D, E)                      # logical rows per slab row
    R = pl.cdiv(M, P)                           # slab rows needed
    tile_r, R_pad, n_steps = _choose_tiling(R, tile_cap)
    M_pad = R_pad * P

    x2d = emb.reshape(M, D)
    if M_pad != M:
        x2d = jnp.pad(x2d, ((0, M_pad - M), (0, 0)))   # zero rows -> finite garbage, sliced off
    x_packed = x2d.reshape(R_pad, P * D)        # contiguous reshape: free layout plumbing

    # Block-diagonal folded weight (bf16 MXU operand) and tiled colsum / bias.
    w_blk = jnp.kron(jnp.eye(P, dtype=f32), w_aff).astype(jnp.bfloat16)   # (P*D, P*E)
    cs_blk = jnp.tile(colsum, P).reshape(1, P * E)                        # f32
    b_blk = jnp.tile(b_aff, P).reshape(1, P * E)                          # f32

    # Group-average matrix (input lane group -> output lane group), bf16
    # (1/32 is exact in bf16).
    gin = jnp.arange(P * D) // D
    gout = jnp.arange(P * E) // E
    avgb = ((gin[:, None] == gout[None, :]).astype(f32) / D).astype(jnp.bfloat16)

    out_packed = pl.pallas_call(
        _wordemb_enc_kernel,
        out_shape=jax.ShapeDtypeStruct((R_pad, P * E), emb.dtype),
        grid_spec=pltpu.PrefetchScalarGridSpec(
            num_scalar_prefetch=0,
            grid=(n_steps,),
            in_specs=[
                pl.BlockSpec((tile_r, P * D), lambda i: (i, 0)),   # packed x
                # Grid-invariant operands (constant index_map -> fetched once):
                pl.BlockSpec((P * D, P * E), lambda i: (0, 0)),    # group-average (bf16)
                pl.BlockSpec((P * D, P * E), lambda i: (0, 0)),    # folded weight (bf16)
                pl.BlockSpec((1, P * E), lambda i: (0, 0)),        # folded colsum
                pl.BlockSpec((1, P * E), lambda i: (0, 0)),        # folded bias
            ],
            out_specs=pl.BlockSpec((tile_r, P * E), lambda i: (i, 0)),
        ),
        compiler_params=pltpu.CompilerParams(
            dimension_semantics=("parallel",),
            vmem_limit_bytes=32 * 1024 * 1024),   # raise v5e's 16 MiB scoped default
    )(x_packed, avgb, w_blk, cs_blk, b_blk)

    # Contiguous un-pack, then drop the padded rows.
    out2d = out_packed.reshape(M_pad, E)[:M]
    return out2d.reshape(B, S, E)


def reference(emb, gamma, beta, w, b):
    """Plain-JAX reference (matches the PyTorch module's LayerNorm path)."""
    mean = jnp.mean(emb, axis=-1, keepdims=True)
    var = jnp.mean((emb - mean) ** 2, axis=-1, keepdims=True)
    xn = (emb - mean) / jnp.sqrt(var + LN_EPS)
    xn = xn * gamma + beta
    y = jnp.einsum("bsd,de->bse", xn, w) + b
    return jnp.tanh(y)


if __name__ == "__main__":
    # Small shapes consistent with the module's forward.  NOTE: at this size a
    # Pallas kernel is pure overhead (plain XLA would win); it exists to be
    # tuned/benchmarked at production batch*seq sizes.
    batch, seq, word_emb_dim, word_emb_enc_dim = 2, 8, 32, 32

    key = jax.random.PRNGKey(0)
    k_emb, k_w, k_b, k_g, k_be = jax.random.split(key, 5)

    emb = jax.random.normal(k_emb, (batch, seq, word_emb_dim), dtype=jnp.float32)

    # Deterministic parameter init (synthetic; no checkpoint load).
    w = jax.random.normal(k_w, (word_emb_dim, word_emb_enc_dim), dtype=jnp.float32) * 0.1
    b = jax.random.normal(k_b, (word_emb_enc_dim,), dtype=jnp.float32) * 0.01
    gamma = 1.0 + 0.05 * jax.random.normal(k_g, (word_emb_dim,), dtype=jnp.float32)
    beta = 0.05 * jax.random.normal(k_be, (word_emb_dim,), dtype=jnp.float32)

    out = word_embedding_encoder(emb, gamma, beta, w, b)
    out = jax.block_until_ready(out)

    ref = reference(emb, gamma, beta, w, b)
    assert out.shape == (batch, seq, word_emb_enc_dim)
    # bf16 MXU operands (weight + stats) => relax tolerance vs. the f32 ref.
    assert jnp.allclose(out, ref, atol=2e-2, rtol=2e-2)

    print("KERNEL_OK")
</pallas_src>

<mosaic_0001>
module attributes {stable_mosaic.version = 11 : i64} {
  func.func @_wordemb_enc_kernel(%arg0: i32, %arg1: memref<16x128xf32, #tpu.memory_space<vmem>>, %arg2: memref<128x128xbf16, #tpu.memory_space<vmem>>, %arg3: memref<128x128xbf16, #tpu.memory_space<vmem>>, %arg4: memref<1x128xf32, #tpu.memory_space<vmem>>, %arg5: memref<1x128xf32, #tpu.memory_space<vmem>>, %arg6: memref<16x128xf32, #tpu.memory_space<vmem>>) attributes {dimension_semantics = [#tpu.dimension_semantics<parallel>], iteration_bounds = array<i64: 1>, scalar_prefetch = 0 : i64, scratch_operands = 0 : i64, tpu.core_type = #tpu.core_type<tc>, window_params = [{transform_indices = @transform_0, window_bounds = array<i64: 16, 128>}, {pipeline_mode = #tpu.pipeline_mode<synchronous>, transform_indices = @transform_1, window_bounds = array<i64: 128, 128>}, {pipeline_mode = #tpu.pipeline_mode<synchronous>, transform_indices = @transform_2, window_bounds = array<i64: 128, 128>}, {pipeline_mode = #tpu.pipeline_mode<synchronous>, transform_indices = @transform_3, window_bounds = array<i64: 1, 128>}, {pipeline_mode = #tpu.pipeline_mode<synchronous>, transform_indices = @transform_4, window_bounds = array<i64: 1, 128>}, {transform_indices = @transform_5, window_bounds = array<i64: 16, 128>}]} {
    %c0 = arith.constant 0 : index
    %c0_0 = arith.constant 0 : index
    %0 = vector.load %arg1[%c0, %c0_0] : memref<16x128xf32, #tpu.memory_space<vmem>>, vector<16x128xf32>
    %1 = arith.truncf %0 : vector<16x128xf32> to vector<16x128xbf16>
    %c0_1 = arith.constant 0 : index
    %c0_2 = arith.constant 0 : index
    %2 = vector.load %arg3[%c0_1, %c0_2] : memref<128x128xbf16, #tpu.memory_space<vmem>>, vector<128x128xbf16>
    %cst = arith.constant dense<0.000000e+00> : vector<16x128xf32>
    %3 = tpu.matmul %1, %2, %cst {dimension_numbers = #tpu.dot_dimension_numbers<[1], [0], [0], [1], [0, 0, 1, 1], [], []>} : vector<16x128xbf16>, vector<128x128xbf16>, vector<16x128xf32> -> vector<16x128xf32>
    %c0_3 = arith.constant 0 : index
    %c0_4 = arith.constant 0 : index
    %4 = vector.load %arg1[%c0_3, %c0_4] : memref<16x128xf32, #tpu.memory_space<vmem>>, vector<16x128xf32>
    %5 = arith.mulf %4, %4 : vector<16x128xf32>
    %6 = arith.truncf %5 : vector<16x128xf32> to vector<16x128xbf16>
    %7 = tpu.concatenate %1, %6 in 0 : vector<16x128xbf16>, vector<16x128xbf16> -> vector<32x128xbf16>
    %c0_5 = arith.constant 0 : index
    %c0_6 = arith.constant 0 : index
    %8 = vector.load %arg2[%c0_5, %c0_6] : memref<128x128xbf16, #tpu.memory_space<vmem>>, vector<128x128xbf16>
    %cst_7 = arith.constant dense<0.000000e+00> : vector<32x128xf32>
    %9 = tpu.matmul %7, %8, %cst_7 {dimension_numbers = #tpu.dot_dimension_numbers<[1], [0], [0], [1], [0, 0, 1, 1], [], []>} : vector<32x128xbf16>, vector<128x128xbf16>, vector<32x128xf32> -> vector<32x128xf32>
    %10 = vector.extract_strided_slice %9 {offsets = [0, 0], sizes = [16, 128], strides = [1, 1]} : vector<32x128xf32> to vector<16x128xf32>
    %11 = vector.extract_strided_slice %9 {offsets = [16, 0], sizes = [16, 128], strides = [1, 1]} : vector<32x128xf32> to vector<16x128xf32>
    %12 = arith.mulf %10, %10 : vector<16x128xf32>
    %13 = arith.subf %11, %12 : vector<16x128xf32>
    %cst_8 = arith.constant 9.99999974E-6 : f32
    %14 = vector.broadcast %cst_8 : f32 to vector<16x128xf32>
    %15 = arith.addf %13, %14 : vector<16x128xf32>
    %16 = math.rsqrt %15 : vector<16x128xf32>
    %c0_9 = arith.constant 0 : index
    %c0_10 = arith.constant 0 : index
    %17 = vector.load %arg4[%c0_9, %c0_10] : memref<1x128xf32, #tpu.memory_space<vmem>>, vector<1x128xf32>
    %18 = vector.broadcast %17 : vector<1x128xf32> to vector<16x128xf32>
    %19 = arith.mulf %10, %18 : vector<16x128xf32>
    %20 = arith.subf %3, %19 : vector<16x128xf32>
    %21 = arith.mulf %16, %20 : vector<16x128xf32>
    %c0_11 = arith.constant 0 : index
    %c0_12 = arith.constant 0 : index
    %22 = vector.load %arg5[%c0_11, %c0_12] : memref<1x128xf32, #tpu.memory_space<vmem>>, vector<1x128xf32>
    %23 = vector.broadcast %22 : vector<1x128xf32> to vector<16x128xf32>
    %24 = arith.addf %21, %23 : vector<16x128xf32>
    %25 = math.tanh %24 : vector<16x128xf32>
    %c0_13 = arith.constant 0 : index
    %c0_14 = arith.constant 0 : index
    %26 = vector.load %arg6[%c0_13, %c0_14] : memref<16x128xf32, #tpu.memory_space<vmem>>, vector<16x128xf32>
    tpu.vector_store %arg6[%c0_13, %c0_14], %25 {strides = array<i32>} : memref<16x128xf32, #tpu.memory_space<vmem>>, vector<16x128xf32>,
    return
  }
  func.func @transform_0(%arg0: i32) -> (i32, i32) {
    %c0_i32 = arith.constant 0 : i32
    %c0_i32_0 = arith.constant 0 : i32
    return %arg0, %c0_i32 : i32, i32
  }
  func.func @transform_1(%arg0: i32) -> (i32, i32) {
    %c0_i32 = arith.constant 0 : i32
    %c0_i32_0 = arith.constant 0 : i32
    %c0_i32_1 = arith.constant 0 : i32
    return %c0_i32, %c0_i32_0 : i32, i32
  }
  func.func @transform_2(%arg0: i32) -> (i32, i32) {
    %c0_i32 = arith.constant 0 : i32
    %c0_i32_0 = arith.constant 0 : i32
    %c0_i32_1 = arith.constant 0 : i32
    return %c0_i32, %c0_i32_0 : i32, i32
  }
  func.func @transform_3(%arg0: i32) -> (i32, i32) {
    %c0_i32 = arith.constant 0 : i32
    %c0_i32_0 = arith.constant 0 : i32
    %c0_i32_1 = arith.constant 0 : i32
    return %c0_i32, %c0_i32_0 : i32, i32
  }
  func.func @transform_4(%arg0: i32) -> (i32, i32) {
    %c0_i32 = arith.constant 0 : i32
    %c0_i32_0 = arith.constant 0 : i32
    %c0_i32_1 = arith.constant 0 : i32
    return %c0_i32, %c0_i32_0 : i32, i32
  }
  func.func @transform_5(%arg0: i32) -> (i32, i32) {
    %c0_i32 = arith.constant 0 : i32
    %c0_i32_0 = arith.constant 0 : i32
    return %arg0, %c0_i32 : i32, i32
  }
}

</mosaic_0001>

<llo_original>
// kernel: tpu_custom_call.1
$region0: #{tpu_custom_call.1}
  #allocation0 [shape = 'u32[]', space=smem, size = 0x4, offset = 0x4, fixed_abs, tag = 'smem constant byte address 0x4 - core index']
  #allocation1 [shape = 'u32[144,128]{1,0:T(1,128)}', space=vmem, size = 0x12000, scoped, tag = 'internal scratch']
  %s0 = inlined_call_operand.hbm [shape: f32[16,128], index: 0, kind: input, shape index: {}]
  %s1 = inlined_call_operand.hbm [shape: bf16[128,128], index: 1, kind: input, shape index: {}]
  %s2 = inlined_call_operand.hbm [shape: bf16[128,128], index: 2, kind: input, shape index: {}]
  %s3 = inlined_call_operand.vmem [shape: f32[1,128], index: 3, kind: input, shape index: {}]
  %s4 = inlined_call_operand.vmem [shape: f32[1,128], index: 4, kind: input, shape index: {}]
  %s5 = inlined_call_operand.hbm [shape: f32[16,128], index: 5, kind: output, shape index: {}]
  %s6 = sld [smem:[#allocation0]]
  $region42: #{tpu_custom_call.1} parent=0
    _
  %s8 = ssub.s32 1, %s6
  %s9 = scalar_select 0, %s8, %s6
  $region1: #{tpu_custom_call.1} parent=0
    #allocation2 [shape = 'u8[8192]{0}', space=vmem, size = 0x2000, scoped, tag = 'input window, operand 0, single buffered']
    #allocation3 [shape = 's32[1]{0}', space=sflag, size = 0x4, scoped, tag = 'scoped memory for tpu_custom_call.1']
    #allocation4 [shape = 's32[1]{0}', space=sflag, size = 0x4, scoped, tag = 'scoped memory for tpu_custom_call.1']
    #allocation5 [shape = 'u8[32768]{0}', space=vmem, size = 0x8000, scoped, tag = 'input window, operand 1, single buffered']
    #allocation6 [shape = 's32[1]{0}', space=sflag, size = 0x4, scoped, tag = 'scoped memory for tpu_custom_call.1']
    #allocation7 [shape = 'u8[32768]{0}', space=vmem, size = 0x8000, scoped, tag = 'input window, operand 2, single buffered']
    #allocation8 [shape = 'u8[8192]{0}', space=vmem, size = 0x2000, scoped, tag = 'output window, operand 0, single buffered']
    %10 = vsyncpa [#allocation3], 0
    %11 = vsyncpa [#allocation6], 0
    %12 = vsyncpa [#allocation4], 0
    // Predicated region
    $region2: #{tpu_custom_call.1} parent=1 // pred_check
      _
    $region3: #{tpu_custom_call.1} parent=1 // pred_check_branch
      %14 = sbr.rel (0) target = $region5
    $region4: #{tpu_custom_call.1} parent=1 // pred_region
      %s16 = ssub.s32 256, 256
      %17 = vsyncadd [#allocation3], %s16
      %s18 = sshll.u32 [#allocation2], 4
      %s19 = int_to_ptr.vmem [resolvable:$true] %s18
      %24 = dma.hbm_to_vmem [thread:$0]  %s0, 256, %s19, [#allocation3], 128, 128, 8
    $region5: #{tpu_custom_call.1} parent=1 // pred_fallthru
      _
    // Predicated region
    $region6: #{tpu_custom_call.1} parent=1 // pred_check
      _
    $region7: #{tpu_custom_call.1} parent=1 // pred_check_branch
      %26 = sbr.rel (0) target = $region9
    $region8: #{tpu_custom_call.1} parent=1 // pred_region
      %s28 = ssub.s32 1024, 1024
      %29 = vsyncadd [#allocation6], %s28
      %s30 = sshll.u32 [#allocation5], 4
      %s31 = int_to_ptr.vmem [resolvable:$true] %s30
      %36 = dma.hbm_to_vmem [thread:$0]  %s1, 1024, %s31, [#allocation6], 64, 64, 4
    $region9: #{tpu_custom_call.1} parent=1 // pred_fallthru
      _
    // Predicated region
    $region10: #{tpu_custom_call.1} parent=1 // pred_check
      _
    $region11: #{tpu_custom_call.1} parent=1 // pred_check_branch
      %38 = sbr.rel (0) target = $region13
    $region12: #{tpu_custom_call.1} parent=1 // pred_region
      %s40 = ssub.s32 1024, 1024
      %41 = vsyncadd [#allocation6], %s40
      %s42 = sshll.u32 [#allocation7], 4
      %s43 = int_to_ptr.vmem [resolvable:$true] %s42
      %48 = dma.hbm_to_vmem [thread:$0]  %s2, 1024, %s43, [#allocation6], 64, 64, 4
    $region13: #{tpu_custom_call.1} parent=1 // pred_fallthru
      _
    // Predicated region
    $region14: #{tpu_custom_call.1} parent=1 // pred_check
      _
    $region15: #{tpu_custom_call.1} parent=1 // pred_check_branch
      %50 = sbr.rel (0) target = $region17
    $region16: #{tpu_custom_call.1} parent=1 // pred_region
      _
    $region17: #{tpu_custom_call.1} parent=1 // pred_fallthru
      _
    // Predicated region
    $region18: #{tpu_custom_call.1} parent=1 // pred_check
      _
    $region19: #{tpu_custom_call.1} parent=1 // pred_check_branch
      %52 = sbr.rel (0) target = $region21
    $region20: #{tpu_custom_call.1} parent=1 // pred_region
      _
    $region21: #{tpu_custom_call.1} parent=1 // pred_fallthru
      _
    // Predicated region
    $region22: #{tpu_custom_call.1} parent=1 // pred_check
      _
    $region23: #{tpu_custom_call.1} parent=1 // pred_check_branch
      %54 = sbr.rel (0) target = $region25
    $region24: #{tpu_custom_call.1} parent=1 // pred_region
      %55 = dma.done [#allocation3], 256
    $region25: #{tpu_custom_call.1} parent=1 // pred_fallthru
      _
    // Predicated region
    $region26: #{tpu_custom_call.1} parent=1 // pred_check
      _
    $region27: #{tpu_custom_call.1} parent=1 // pred_check_branch
      %57 = sbr.rel (0) target = $region29
    $region28: #{tpu_custom_call.1} parent=1 // pred_region
      %58 = dma.done [#allocation6], 1024
    $region29: #{tpu_custom_call.1} parent=1 // pred_fallthru
      _
    // Predicated region
    $region30: #{tpu_custom_call.1} parent=1 // pred_check
      _
    $region31: #{tpu_custom_call.1} parent=1 // pred_check_branch
      %60 = sbr.rel (0) target = $region33
    $region32: #{tpu_custom_call.1} parent=1 // pred_region
      %61 = dma.done [#allocation6], 1024
    $region33: #{tpu_custom_call.1} parent=1 // pred_fallthru
      _
    %v63 = vld [vmem:[#allocation2] sm:$0xff]
    %v64 = vld [vmem:[#allocation2 + $0x8] sm:$0xff]
    %v65 = vpack.c.bf16 %v64, %v63
    %v66 = vld [vmem:[#allocation7] sm:$0xf]
    %v67 = vld [vmem:[#allocation7 + $0x4] sm:$0xf]
    %v68 = vld [vmem:[#allocation7 + $0x8] sm:$0xf]
    %v69 = vld [vmem:[#allocation7 + $0xc] sm:$0xf]
    %v70 = vld [vmem:[#allocation7 + $0x10] sm:$0xf]
    %v71 = vld [vmem:[#allocation7 + $0x14] sm:$0xf]
    %v72 = vld [vmem:[#allocation7 + $0x18] sm:$0xf]
    %v73 = vld [vmem:[#allocation7 + $0x1c] sm:$0xf]
    %v74 = vld [vmem:[#allocation7 + $0x20] sm:$0xf]
    %v75 = vld [vmem:[#allocation7 + $0x24] sm:$0xf]
    %v76 = vld [vmem:[#allocation7 + $0x28] sm:$0xf]
    %v77 = vld [vmem:[#allocation7 + $0x2c] sm:$0xf]
    %v78 = vld [vmem:[#allocation7 + $0x30] sm:$0xf]
    %v79 = vld [vmem:[#allocation7 + $0x34] sm:$0xf]
    %v80 = vld [vmem:[#allocation7 + $0x38] sm:$0xf]
    %v81 = vld [vmem:[#allocation7 + $0x3c] sm:$0xf]
    %v98 = vunpack.c.l.b16 %v66
    %v99 = vunpack.c.l.b16 %v67
    %v100 = vunpack.c.l.b16 %v68
    %v101 = vunpack.c.l.b16 %v69
    %v102 = vunpack.c.l.b16 %v70
    %v103 = vunpack.c.l.b16 %v71
    %v104 = vunpack.c.l.b16 %v72
    %v105 = vunpack.c.l.b16 %v73
    %v106 = vunpack.c.l.b16 %v74
    %v107 = vunpack.c.l.b16 %v75
    %v108 = vunpack.c.l.b16 %v76
    %v109 = vunpack.c.l.b16 %v77
    %v110 = vunpack.c.l.b16 %v78
    %v111 = vunpack.c.l.b16 %v79
    %v112 = vunpack.c.l.b16 %v80
    %v113 = vunpack.c.l.b16 %v81
    %v114 = vpack.c.b16 %v99, %v98
    %v115 = vpack.c.b16 %v101, %v100
    %v116 = vpack.c.b16 %v103, %v102
    %v117 = vpack.c.b16 %v105, %v104
    %v118 = vpack.c.b16 %v107, %v106
    %v119 = vpack.c.b16 %v109, %v108
    %v120 = vpack.c.b16 %v111, %v110
    %v121 = vpack.c.b16 %v113, %v112
    %130 = vmatprep.subr.bf16.mxu0 0
    %131 = vmatpush1.bf16.msra.mxu0 %v114
    %132 = vmatprep.subr.bf16.mxu0 0
    %133 = vmatpush1.bf16.msra.mxu0 %v115
    %134 = vmatprep.subr.bf16.mxu0 0
    %135 = vmatpush1.bf16.msra.mxu0 %v116
    %136 = vmatprep.subr.bf16.mxu0 0
    %137 = vmatpush1.bf16.msra.mxu0 %v117
    %138 = vmatprep.subr.bf16.mxu0 0
    %139 = vmatpush1.bf16.msra.mxu0 %v118
    %140 = vmatprep.subr.bf16.mxu0 0
    %141 = vmatpush1.bf16.msra.mxu0 %v119
    %142 = vmatprep.subr.bf16.mxu0 0
    %143 = vmatpush1.bf16.msra.mxu0 %v120
    %144 = vmatprep.subr.bf16.mxu0 0
    %145 = vmatpush1.bf16.msra.mxu0 %v121
    %146 = vmatprep.subr.bf16.mxu0 0
    %147 = vmatpush1.bf16.msra.mxu0 0
    %148 = vmatprep.subr.bf16.mxu0 0
    %149 = vmatpush1.bf16.msra.mxu0 0
    %150 = vmatprep.subr.bf16.mxu0 0
    %151 = vmatpush1.bf16.msra.mxu0 0
    %152 = vmatprep.subr.bf16.mxu0 0
    %153 = vmatpush1.bf16.msra.mxu0 0
    %154 = vmatprep.subr.bf16.mxu0 0
    %155 = vmatpush1.bf16.msra.mxu0 0
    %156 = vmatprep.subr.bf16.mxu0 0
    %157 = vmatpush1.bf16.msra.mxu0 0
    %158 = vmatprep.subr.bf16.mxu0 0
    %159 = vmatpush1.bf16.msra.mxu0 0
    %160 = vmatprep.subr.bf16.mxu0 0
    %161 = vmatpush1.bf16.msra.mxu0 0
    %162 = vmatprep.mubr.bf16.mxu0 0
    %163 = vmatmul.mubr.bf16.gmra.mrb[0].mxu0 %v65
    %v164 = vpop.f32.mrb[0].mxu0
    %v165 = vadd.f32 0.0, %v164
    %v166 = vpop.f32.mrb[0].mxu0
    %v167 = vpop.f32.mrb[0].mxu0
    %v168 = vadd.f32 0.0, %v167
    %v169 = vpop.f32.mrb[0].mxu0
    %170 = vdwg.mxu0
    %v171 = vmul.f32 %v63, %v63
    %v172 = vmul.f32 %v64, %v64
    %v173 = vpack.c.bf16 %v172, %v171
    %v174 = vld [vmem:[#allocation5] sm:$0xf]
    %v175 = vld [vmem:[#allocation5 + $0x4] sm:$0xf]
    %v176 = vld [vmem:[#allocation5 + $0x8] sm:$0xf]
    %v177 = vld [vmem:[#allocation5 + $0xc] sm:$0xf]
    %v178 = vld [vmem:[#allocation5 + $0x10] sm:$0xf]
    %v179 = vld [vmem:[#allocation5 + $0x14] sm:$0xf]
    %v180 = vld [vmem:[#allocation5 + $0x18] sm:$0xf]
    %v181 = vld [vmem:[#allocation5 + $0x1c] sm:$0xf]
    %v182 = vld [vmem:[#allocation5 + $0x20] sm:$0xf]
    %v183 = vld [vmem:[#allocation5 + $0x24] sm:$0xf]
    %v184 = vld [vmem:[#allocation5 + $0x28] sm:$0xf]
    %v185 = vld [vmem:[#allocation5 + $0x2c] sm:$0xf]
    %v186 = vld [vmem:[#allocation5 + $0x30] sm:$0xf]
    %v187 = vld [vmem:[#allocation5 + $0x34] sm:$0xf]
    %v188 = vld [vmem:[#allocation5 + $0x38] sm:$0xf]
    %v189 = vld [vmem:[#allocation5 + $0x3c] sm:$0xf]
    %v206 = vunpack.c.l.b16 %v174
    %v207 = vunpack.c.l.b16 %v175
    %v208 = vunpack.c.l.b16 %v176
    %v209 = vunpack.c.l.b16 %v177
    %v210 = vunpack.c.l.b16 %v178
    %v211 = vunpack.c.l.b16 %v179
    %v212 = vunpack.c.l.b16 %v180
    %v213 = vunpack.c.l.b16 %v181
    %v214 = vunpack.c.l.b16 %v182
    %v215 = vunpack.c.l.b16 %v183
    %v216 = vunpack.c.l.b16 %v184
    %v217 = vunpack.c.l.b16 %v185
    %v218 = vunpack.c.l.b16 %v186
    %v219 = vunpack.c.l.b16 %v187
    %v220 = vunpack.c.l.b16 %v188
    %v221 = vunpack.c.l.b16 %v189
    %v222 = vpack.c.b16 %v207, %v206
    %v223 = vpack.c.b16 %v209, %v208
    %v224 = vpack.c.b16 %v211, %v210
    %v225 = vpack.c.b16 %v213, %v212
    %v226 = vpack.c.b16 %v215, %v214
    %v227 = vpack.c.b16 %v217, %v216
    %v228 = vpack.c.b16 %v219, %v218
    %v229 = vpack.c.b16 %v221, %v220
    %238 = vmatprep.subr.bf16.mxu0 0
    %239 = vmatpush1.bf16.msra.mxu0 %v222
    %240 = vmatprep.subr.bf16.mxu0 0
    %241 = vmatpush1.bf16.msra.mxu0 %v223
    %242 = vmatprep.subr.bf16.mxu0 0
    %243 = vmatpush1.bf16.msra.mxu0 %v224
    %244 = vmatprep.subr.bf16.mxu0 0
    %245 = vmatpush1.bf16.msra.mxu0 %v225
    %246 = vmatprep.subr.bf16.mxu0 0
    %247 = vmatpush1.bf16.msra.mxu0 %v226
    %248 = vmatprep.subr.bf16.mxu0 0
    %249 = vmatpush1.bf16.msra.mxu0 %v227
    %250 = vmatprep.subr.bf16.mxu0 0
    %251 = vmatpush1.bf16.msra.mxu0 %v228
    %252 = vmatprep.subr.bf16.mxu0 0
    %253 = vmatpush1.bf16.msra.mxu0 %v229
    %254 = vmatprep.subr.bf16.mxu0 0
    %255 = vmatpush1.bf16.msra.mxu0 0
    %256 = vmatprep.subr.bf16.mxu0 0
    %257 = vmatpush1.bf16.msra.mxu0 0
    %258 = vmatprep.subr.bf16.mxu0 0
    %259 = vmatpush1.bf16.msra.mxu0 0
    %260 = vmatprep.subr.bf16.mxu0 0
    %261 = vmatpush1.bf16.msra.mxu0 0
    %262 = vmatprep.subr.bf16.mxu0 0
    %263 = vmatpush1.bf16.msra.mxu0 0
    %264 = vmatprep.subr.bf16.mxu0 0
    %265 = vmatpush1.bf16.msra.mxu0 0
    %266 = vmatprep.subr.bf16.mxu0 0
    %267 = vmatpush1.bf16.msra.mxu0 0
    %268 = vmatprep.subr.bf16.mxu0 0
    %269 = vmatpush1.bf16.msra.mxu0 0
    %270 = vmatprep.mubr.bf16.mxu0 0
    %271 = vmatmul.mubr.bf16.gmra.mrb[0].mxu0 %v65
    %v272 = vpop.f32.mrb[0].mxu0
    %v273 = vadd.f32 0.0, %v272
    %v274 = vpop.f32.mrb[0].mxu0
    %v275 = vpop.f32.mrb[0].mxu0
    %v276 = vadd.f32 0.0, %v275
    %v277 = vpop.f32.mrb[0].mxu0
    %278 = vmatprep.mubr.bf16.mxu0 0
    %279 = vmatmul.mubr.bf16.gmra.mrb[0].mxu0 %v173
    %v280 = vpop.f32.mrb[0].mxu0
    %v281 = vadd.f32 0.0, %v280
    %v282 = vpop.f32.mrb[0].mxu0
    %v283 = vpop.f32.mrb[0].mxu0
    %v284 = vadd.f32 0.0, %v283
    %v285 = vpop.f32.mrb[0].mxu0
    %286 = vdwg.mxu0
    %v287 = vmul.f32 %v273, %v273
    %v288 = vmul.f32 %v276, %v276
    %v289 = vsub.f32 %v281, %v287
    %v290 = vsub.f32 %v284, %v288
    %v291 = vadd.f32 %v289, 1e-05
    %v292 = vadd.f32 %v290, 1e-05
    %v293 = vrsqrt.pop %v291
    %v294 = vrsqrt.pop %v292
    %v295 = vld [vmem:[%s3] sm:$0x1]
    %v297 = vlaneseq
    %v298 = vshrl.u32 %v297, 7
    %v299 = vsub.s32 0, %v298
    %v300 = vrot.slane %v295, %v299
    %v302 = vmul.f32 %v273, %v300
    %v303 = vmul.f32 %v276, %v300
    %v304 = vsub.f32 %v165, %v302
    %v305 = vsub.f32 %v168, %v303
    %v306 = vmul.f32 %v293, %v304
    %v307 = vmul.f32 %v294, %v305
    %v308 = vld [vmem:[%s4] sm:$0x1]
    %v310 = vlaneseq
    %v311 = vshrl.u32 %v310, 7
    %v312 = vsub.s32 0, %v311
    %v313 = vrot.slane %v308, %v312
    %v315 = vadd.f32 %v306, %v313
    %v316 = vadd.f32 %v307, %v313
    %v317 = vtanh.pop %v315
    %v318 = vtanh.pop %v316
    %319 = vst [vmem:[#allocation8] sm:$0xff] %v317
    %320 = vst [vmem:[#allocation8 + $0x8] sm:$0xff] %v318
    // Predicated region
    $region34: #{tpu_custom_call.1} parent=1 // pred_check
      _
    $region35: #{tpu_custom_call.1} parent=1 // pred_check_branch
      %322 = sbr.rel (0) target = $region37
    $region36: #{tpu_custom_call.1} parent=1 // pred_region
      %s324 = ssub.s32 256, 256
      %325 = vsyncadd [#allocation4], %s324
      %s326 = sshll.u32 [#allocation8], 4
      %s327 = int_to_ptr.vmem [resolvable:$true] %s326
      %332 = dma.vmem_to_hbm [thread:$0]  %s327, 256, %s5, [#allocation4], 128, 128, 8
    $region37: #{tpu_custom_call.1} parent=1 // pred_fallthru
      _
    // Predicated region
    $region38: #{tpu_custom_call.1} parent=1 // pred_check
      _
    $region39: #{tpu_custom_call.1} parent=1 // pred_check_branch
      %334 = sbr.rel (0) target = $region41
    $region40: #{tpu_custom_call.1} parent=1 // pred_region
      %335 = dma.done [#allocation4], 256
    $region41: #{tpu_custom_call.1} parent=1 // pred_fallthru
      _
    %336 = vsyncpa [#allocation3], 1
    %337 = vsyncpa [#allocation6], 1
    %338 = vsyncpa [#allocation4], 1

</llo_original>
